<compile_context>
chip_gen: v7x
topology: tpu7x:2x2x1
jax: 0.10.0
libtpu: 0.0.40
codegen_flags: <defaults>
</compile_context>

<pallas_src>
import functools
from collections import defaultdict

import numpy as np
import jax
import jax.numpy as jnp
from jax import lax
from jax.experimental import pallas as pl
from jax.experimental.pallas import tpu as pltpu


def _round_up(x, m):
    return ((x + m - 1) // m) * m


# ----------------------------------------------------------------------------
# Pallas kernel: fused projector Linear -> vocab head Linear -> log_softmax
# ----------------------------------------------------------------------------
def _proj_head_logsoftmax_kernel(x_ref, w1_ref, b1_ref, w2_ref, b2_ref, out_ref,
                                 *, row_chunk):
    # weights / biases loaded once per grid step (hoisted out of the row-chunk loop)
    w1 = w1_ref[...]          # (D_up_p, D_pr_p) bf16
    b1 = b1_ref[...]          # (1, D_pr_p)      f32
    w2 = w2_ref[...]          # (D_pr_p, V_p)    bf16
    b2 = b2_ref[...]          # (1, V_p)         f32  (padded vocab cols = -1e30)

    n_chunks = x_ref.shape[0] // row_chunk

    def body(c, carry):
        r0 = pl.multiple_of(c * row_chunk, row_chunk)
        x = x_ref[pl.ds(r0, row_chunk), :]                                   # bf16
        h = jnp.dot(x, w1, preferred_element_type=jnp.float32) + b1          # f32
        logits = jnp.dot(h.astype(jnp.bfloat16), w2,
                         preferred_element_type=jnp.float32) + b2            # f32
        # numerically-stable log_softmax over the (lane-dense, 128-padded) vocab axis;
        # padded columns sit at ~-1e30 so they never win the max nor add to the sum.
        m = jnp.max(logits, axis=-1, keepdims=True)
        s = logits - m
        lse = jnp.log(jnp.sum(jnp.exp(s), axis=-1, keepdims=True))
        out_ref[pl.ds(r0, row_chunk), :] = (s - lse).astype(out_ref.dtype)
        return carry

    lax.fori_loop(0, n_chunks, body, 0, unroll=True)


def asr_head_log_probs(features, w1p, b1p, w2p, b2p, vocab_size,
                       *, tile_rows=256, row_chunk=128):
    """features: (B, T, D_up) f32 -> log_probs: (B, T, vocab_size) f32."""
    B, T, D_up = features.shape
    D_up_p, D_pr_p = w1p.shape
    V_p = w2p.shape[1]
    rows = B * T

    # pad rows so the grid is an even multiple of tile_rows (>= 2 grid steps, keeps
    # both v7x TensorCores busy under dimension_semantics=("parallel",))
    rows_p = _round_up(max(rows, 2 * tile_rows), 2 * tile_rows)
    assert tile_rows % row_chunk == 0

    x2 = features.reshape(rows, D_up).astype(jnp.bfloat16)
    x2 = jnp.pad(x2, ((0, rows_p - rows), (0, D_up_p - D_up)))

    grid = rows_p // tile_rows
    kernel = functools.partial(_proj_head_logsoftmax_kernel, row_chunk=row_chunk)

    out = pl.pallas_call(
        kernel,
        out_shape=jax.ShapeDtypeStruct((rows_p, V_p), jnp.float32),
        grid_spec=pltpu.PrefetchScalarGridSpec(
            num_scalar_prefetch=0,
            grid=(grid,),
            in_specs=[
                pl.BlockSpec((tile_rows, D_up_p), lambda i: (i, 0)),
                pl.BlockSpec((D_up_p, D_pr_p), lambda i: (0, 0)),
                pl.BlockSpec((1, D_pr_p), lambda i: (0, 0)),
                pl.BlockSpec((D_pr_p, V_p), lambda i: (0, 0)),
                pl.BlockSpec((1, V_p), lambda i: (0, 0)),
            ],
            out_specs=pl.BlockSpec((tile_rows, V_p), lambda i: (i, 0)),
        ),
        compiler_params=pltpu.CompilerParams(
            dimension_semantics=("parallel",),
            vmem_limit_bytes=48 * 1024 * 1024,
        ),
    )(x2, w1p, b1p, w2p, b2p)

    # drop padded rows / padded vocab columns (padded rows are garbage but unused)
    return out[:rows, :vocab_size].reshape(B, T, vocab_size)


# ----------------------------------------------------------------------------
# CTC loss (plain JAX glue; matches torch.nn.CTCLoss with reduction='mean',
# blank=dictionary.bos(), zero_infinity=True)
# ----------------------------------------------------------------------------
def ctc_loss_mean(log_probs, labels, input_lens, label_lens, blank):
    # log_probs: (B, T, V) f32, labels: (B, L) int32 (padded)
    B, T, V = log_probs.shape
    L = labels.shape[1]
    S = 2 * L + 1
    neg_inf = jnp.float32(-jnp.inf)

    # extended label sequence: blank, l1, blank, l2, ..., blank
    ext = jnp.full((B, S), blank, dtype=jnp.int32)
    ext = ext.at[:, 1::2].set(labels.astype(jnp.int32))
    ext_m2 = jnp.concatenate(
        [jnp.full((B, 2), blank, dtype=jnp.int32), ext[:, :-2]], axis=1)
    skip_ok = (ext != blank) & (ext != ext_m2)                        # (B, S)

    # hoist the emit gather out of the scan: (B, T, S) -> (T, B, S)
    emit_all = jnp.take_along_axis(
        log_probs, jnp.broadcast_to(ext[:, None, :], (B, T, S)), axis=2)
    emit_t = jnp.swapaxes(emit_all, 0, 1)

    # alpha at t = 0
    alpha0 = jnp.full((B, S), neg_inf)
    alpha0 = alpha0.at[:, 0].set(emit_t[0, :, 0])
    alpha0 = alpha0.at[:, 1].set(emit_t[0, :, 1])

    input_lens = input_lens.astype(jnp.int32)
    label_lens = label_lens.astype(jnp.int32)

    def step(carry, inp):
        alpha, alpha_fin = carry
        t, emit = inp                                                 # emit: (B, S)
        a_s1 = jnp.concatenate([jnp.full((B, 1), neg_inf), alpha[:, :-1]], axis=1)
        a_s2 = jnp.concatenate([jnp.full((B, 2), neg_inf), alpha[:, :-2]], axis=1)
        comb = jnp.logaddexp(alpha, a_s1)
        comb = jnp.where(skip_ok, jnp.logaddexp(comb, a_s2), comb)
        new_alpha = comb + emit
        # track alpha at t == input_len - 1 without materializing (T, B, S)
        alpha_fin = jnp.where((t == input_lens - 1)[:, None], new_alpha, alpha_fin)
        return (new_alpha, alpha_fin), None

    (_, alpha_final), _ = lax.scan(
        step, (alpha0, alpha0), (jnp.arange(1, T, dtype=jnp.int32), emit_t[1:]))

    s_last = 2 * label_lens                                           # final blank state
    a_blank = jnp.take_along_axis(alpha_final, s_last[:, None], axis=1)[:, 0]
    a_label = jnp.take_along_axis(
        alpha_final, jnp.clip(s_last - 1, 0, S - 1)[:, None], axis=1)[:, 0]
    a_label = jnp.where(label_lens > 0, a_label, neg_inf)             # empty-label guard
    loss_b = -jnp.logaddexp(a_blank, a_label)                         # per-sample NLL

    loss_b = jnp.where(jnp.isfinite(loss_b), loss_b, 0.0)             # zero_infinity=True
    denom = jnp.maximum(label_lens.astype(jnp.float32), 1.0)
    return jnp.mean(loss_b / denom)                                   # reduction='mean'


# ----------------------------------------------------------------------------
# DownstreamExpert.forward (Pallas-backed)
# ----------------------------------------------------------------------------
class DownstreamExpertPallas:
    # fairseq Dictionary special symbols
    BOS = 0   # used as CTC blank
    PAD = 1
    EOS = 2

    def __init__(self, upstream_dim, project_dim, vocab_size, key):
        k1, k2, k3, k4 = jax.random.split(key, 4)
        scale1 = 1.0 / np.sqrt(upstream_dim)
        scale2 = 1.0 / np.sqrt(project_dim)
        # projector: Linear(upstream_dim, project_dim)
        w1 = jax.random.normal(k1, (upstream_dim, project_dim), jnp.float32) * scale1
        b1 = jax.random.normal(k2, (project_dim,), jnp.float32) * scale1
        # model head: project_dim -> vocab_size (see TODO at top of file)
        w2 = jax.random.normal(k3, (project_dim, vocab_size), jnp.float32) * scale2
        b2 = jax.random.normal(k4, (vocab_size,), jnp.float32) * scale2

        self.upstream_dim = upstream_dim
        self.project_dim = project_dim
        self.vocab_size = vocab_size
        self.blank = self.BOS

        # pad once at init: contraction dims and vocab dim to multiples of 128
        # (MXU-native tiles, lane-dense output), bf16 matmul operands.
        d_up_p = _round_up(upstream_dim, 128)
        d_pr_p = _round_up(project_dim, 128)
        v_p = _round_up(vocab_size, 128)
        self.w1p = (jnp.zeros((d_up_p, d_pr_p), jnp.bfloat16)
                    .at[:upstream_dim, :project_dim].set(w1.astype(jnp.bfloat16)))
        self.b1p = jnp.zeros((1, d_pr_p), jnp.float32).at[0, :project_dim].set(b1)
        self.w2p = (jnp.zeros((d_pr_p, v_p), jnp.bfloat16)
                    .at[:project_dim, :vocab_size].set(w2.astype(jnp.bfloat16)))
        # padded vocab columns get a huge negative bias -> masked out of log_softmax
        self.b2p = jnp.full((1, v_p), -1e30, jnp.float32).at[0, :vocab_size].set(b2)

    def forward(self, features_padded, features_len, labels_padded, labels_len, records):
        # projector -> model head -> log_softmax (single fused Pallas kernel)
        log_probs = asr_head_log_probs(
            features_padded, self.w1p, self.b1p, self.w2p, self.b2p, self.vocab_size)
        log_probs_len = features_len                                  # identity downsample
        loss = ctc_loss_mean(log_probs, labels_padded, log_probs_len, labels_len, self.blank)
        records["loss"].append(float(loss))

        # greedy decode for metrics: argmax on device, only (B, T) int32 ids to host.
        # TODO(synk): dictionary.string / editdistance / external W2l decoders are
        #             host-side string ops with no Pallas equivalent.
        ids_dev = jnp.argmax(log_probs, axis=-1).astype(jnp.int32)    # (B, T)
        ids_np = np.asarray(ids_dev)
        lens_np = np.asarray(features_len)
        labels_np = np.asarray(labels_padded)
        for b in range(ids_np.shape[0]):
            ids = ids_np[b, : int(lens_np[b])]
            collapsed = [int(t) for i, t in enumerate(ids) if i == 0 or t != ids[i - 1]]
            pred = [t for t in collapsed if t != self.blank]
            records["pred_tokens"].append(pred)
            tgt = [int(t) for t in labels_np[b] if t != self.PAD and t != self.EOS]
            records["target_tokens"].append(tgt)
        return loss


if __name__ == "__main__":
    key = jax.random.PRNGKey(0)
    kx, kl, kp = jax.random.split(key, 3)

    # small shapes consistent with the module
    B, T, UPSTREAM_DIM, PROJECT_DIM, VOCAB = 2, 16, 32, 64, 16
    feat_lens = np.array([16, 12], dtype=np.int32)
    lab_lens = np.array([5, 3], dtype=np.int32)
    L_MAX = int(lab_lens.max())

    # variable-length features, zero-padded to (B, T, UPSTREAM_DIM)
    feats_full = jax.random.normal(kx, (B, T, UPSTREAM_DIM), jnp.float32)
    time_mask = (np.arange(T)[None, :] < feat_lens[:, None]).astype(np.float32)
    features_padded = feats_full * jnp.asarray(time_mask)[:, :, None]

    # labels in [4, VOCAB), padded with dictionary.pad() == 1
    labels_full = jax.random.randint(kl, (B, L_MAX), 4, VOCAB, dtype=jnp.int32)
    lab_mask = np.arange(L_MAX)[None, :] < lab_lens[:, None]
    labels_padded = jnp.where(jnp.asarray(lab_mask), labels_full,
                              DownstreamExpertPallas.PAD).astype(jnp.int32)

    expert = DownstreamExpertPallas(UPSTREAM_DIM, PROJECT_DIM, VOCAB, kp)
    records = defaultdict(list)
    loss = expert.forward(features_padded,
                          jnp.asarray(feat_lens),
                          labels_padded,
                          jnp.asarray(lab_lens),
                          records)
    jax.block_until_ready(loss)
    assert np.isfinite(float(loss))
    print("KERNEL_OK")
</pallas_src>

<mosaic_0001>
module attributes {stable_mosaic.version = 11 : i64} {
  func.func @_proj_head_logsoftmax_kernel(%arg0: i32, %arg1: memref<256x128xbf16, #tpu.memory_space<vmem>>, %arg2: memref<128x128xbf16, #tpu.memory_space<vmem>>, %arg3: memref<1x128xf32, #tpu.memory_space<vmem>>, %arg4: memref<128x128xbf16, #tpu.memory_space<vmem>>, %arg5: memref<1x128xf32, #tpu.memory_space<vmem>>, %arg6: memref<256x128xf32, #tpu.memory_space<vmem>>) attributes {dimension_semantics = [#tpu.dimension_semantics<parallel>], iteration_bounds = array<i64: 2>, scalar_prefetch = 0 : i64, scratch_operands = 0 : i64, tpu.core_type = #tpu.core_type<tc>, window_params = [{transform_indices = @transform_0, window_bounds = array<i64: 256, 128>}, {pipeline_mode = #tpu.pipeline_mode<synchronous>, transform_indices = @transform_1, window_bounds = array<i64: 128, 128>}, {pipeline_mode = #tpu.pipeline_mode<synchronous>, transform_indices = @transform_2, window_bounds = array<i64: 1, 128>}, {pipeline_mode = #tpu.pipeline_mode<synchronous>, transform_indices = @transform_3, window_bounds = array<i64: 128, 128>}, {pipeline_mode = #tpu.pipeline_mode<synchronous>, transform_indices = @transform_4, window_bounds = array<i64: 1, 128>}, {transform_indices = @transform_5, window_bounds = array<i64: 256, 128>}]} {
    %c0 = arith.constant 0 : index
    %c0_0 = arith.constant 0 : index
    %0 = vector.load %arg2[%c0, %c0_0] : memref<128x128xbf16, #tpu.memory_space<vmem>>, vector<128x128xbf16>
    %c0_1 = arith.constant 0 : index
    %c0_2 = arith.constant 0 : index
    %1 = vector.load %arg3[%c0_1, %c0_2] : memref<1x128xf32, #tpu.memory_space<vmem>>, vector<1x128xf32>
    %c0_3 = arith.constant 0 : index
    %c0_4 = arith.constant 0 : index
    %2 = vector.load %arg4[%c0_3, %c0_4] : memref<128x128xbf16, #tpu.memory_space<vmem>>, vector<128x128xbf16>
    %c0_5 = arith.constant 0 : index
    %c0_6 = arith.constant 0 : index
    %3 = vector.load %arg5[%c0_5, %c0_6] : memref<1x128xf32, #tpu.memory_space<vmem>>, vector<1x128xf32>
    %c0_i32 = arith.constant 0 : i32
    %c128_i32 = arith.constant 128 : i32
    %4 = arith.muli %c0_i32, %c128_i32 : i32
    %5 = tpu.assume_multiple %4, 128 : i32
    %6 = arith.index_cast %5 : i32 to index
    %c0_7 = arith.constant 0 : index
    %7 = vector.load %arg1[%6, %c0_7] : memref<256x128xbf16, #tpu.memory_space<vmem>>, vector<128x128xbf16>
    %cst = arith.constant dense<0.000000e+00> : vector<128x128xf32>
    %8 = tpu.matmul %7, %0, %cst {dimension_numbers = #tpu.dot_dimension_numbers<[1], [0], [0], [1], [0, 0, 1, 1], [], []>} : vector<128x128xbf16>, vector<128x128xbf16>, vector<128x128xf32> -> vector<128x128xf32>
    %9 = vector.broadcast %1 : vector<1x128xf32> to vector<128x128xf32>
    %10 = arith.addf %8, %9 : vector<128x128xf32>
    %11 = arith.truncf %10 : vector<128x128xf32> to vector<128x128xbf16>
    %cst_8 = arith.constant dense<0.000000e+00> : vector<128x128xf32>
    %12 = tpu.matmul %11, %2, %cst_8 {dimension_numbers = #tpu.dot_dimension_numbers<[1], [0], [0], [1], [0, 0, 1, 1], [], []>} : vector<128x128xbf16>, vector<128x128xbf16>, vector<128x128xf32> -> vector<128x128xf32>
    %13 = vector.broadcast %3 : vector<1x128xf32> to vector<128x128xf32>
    %14 = arith.addf %12, %13 : vector<128x128xf32>
    %cst_9 = arith.constant dense<0xFF800000> : vector<128xf32>
    %15 = vector.multi_reduction <maximumf>, %14, %cst_9 [1] : vector<128x128xf32> to vector<128xf32>
    %16 = vector.shape_cast %15 : vector<128xf32> to vector<128x1xf32>
    %17 = vector.broadcast %16 : vector<128x1xf32> to vector<128x128xf32>
    %18 = arith.subf %14, %17 : vector<128x128xf32>
    %19 = math.exp %18 : vector<128x128xf32>
    %cst_10 = arith.constant dense<0.000000e+00> : vector<128xf32>
    %20 = vector.multi_reduction <add>, %19, %cst_10 [1] : vector<128x128xf32> to vector<128xf32>
    %21 = vector.shape_cast %20 : vector<128xf32> to vector<128x1xf32>
    %22 = math.log %21 : vector<128x1xf32>
    %23 = vector.broadcast %22 : vector<128x1xf32> to vector<128x128xf32>
    %24 = arith.subf %18, %23 : vector<128x128xf32>
    %25 = arith.index_cast %5 : i32 to index
    %c0_11 = arith.constant 0 : index
    %26 = vector.load %arg6[%25, %c0_11] : memref<256x128xf32, #tpu.memory_space<vmem>>, vector<128x128xf32>
    tpu.vector_store %arg6[%25, %c0_11], %24 {strides = array<i32>} : memref<256x128xf32, #tpu.memory_space<vmem>>, vector<128x128xf32>,
    %c1_i32 = arith.constant 1 : i32
    %c128_i32_12 = arith.constant 128 : i32
    %27 = arith.muli %c1_i32, %c128_i32_12 : i32
    %28 = tpu.assume_multiple %27, 128 : i32
    %29 = arith.index_cast %28 : i32 to index
    %c0_13 = arith.constant 0 : index
    %30 = vector.load %arg1[%29, %c0_13] : memref<256x128xbf16, #tpu.memory_space<vmem>>, vector<128x128xbf16>
    %cst_14 = arith.constant dense<0.000000e+00> : vector<128x128xf32>
    %31 = tpu.matmul %30, %0, %cst_14 {dimension_numbers = #tpu.dot_dimension_numbers<[1], [0], [0], [1], [0, 0, 1, 1], [], []>} : vector<128x128xbf16>, vector<128x128xbf16>, vector<128x128xf32> -> vector<128x128xf32>
    %32 = vector.broadcast %1 : vector<1x128xf32> to vector<128x128xf32>
    %33 = arith.addf %31, %32 : vector<128x128xf32>
    %34 = arith.truncf %33 : vector<128x128xf32> to vector<128x128xbf16>
    %cst_15 = arith.constant dense<0.000000e+00> : vector<128x128xf32>
    %35 = tpu.matmul %34, %2, %cst_15 {dimension_numbers = #tpu.dot_dimension_numbers<[1], [0], [0], [1], [0, 0, 1, 1], [], []>} : vector<128x128xbf16>, vector<128x128xbf16>, vector<128x128xf32> -> vector<128x128xf32>
    %36 = vector.broadcast %3 : vector<1x128xf32> to vector<128x128xf32>
    %37 = arith.addf %35, %36 : vector<128x128xf32>
    %cst_16 = arith.constant dense<0xFF800000> : vector<128xf32>
    %38 = vector.multi_reduction <maximumf>, %37, %cst_16 [1] : vector<128x128xf32> to vector<128xf32>
    %39 = vector.shape_cast %38 : vector<128xf32> to vector<128x1xf32>
    %40 = vector.broadcast %39 : vector<128x1xf32> to vector<128x128xf32>
    %41 = arith.subf %37, %40 : vector<128x128xf32>
    %42 = math.exp %41 : vector<128x128xf32>
    %cst_17 = arith.constant dense<0.000000e+00> : vector<128xf32>
    %43 = vector.multi_reduction <add>, %42, %cst_17 [1] : vector<128x128xf32> to vector<128xf32>
    %44 = vector.shape_cast %43 : vector<128xf32> to vector<128x1xf32>
    %45 = math.log %44 : vector<128x1xf32>
    %46 = vector.broadcast %45 : vector<128x1xf32> to vector<128x128xf32>
    %47 = arith.subf %41, %46 : vector<128x128xf32>
    %48 = arith.index_cast %28 : i32 to index
    %c0_18 = arith.constant 0 : index
    %49 = vector.load %arg6[%48, %c0_18] : memref<256x128xf32, #tpu.memory_space<vmem>>, vector<128x128xf32>
    tpu.vector_store %arg6[%48, %c0_18], %47 {strides = array<i32>} : memref<256x128xf32, #tpu.memory_space<vmem>>, vector<128x128xf32>,
    %c2_i32 = arith.constant 2 : i32
    return
  }
  func.func @transform_0(%arg0: i32) -> (i32, i32) {
    %c0_i32 = arith.constant 0 : i32
    %c0_i32_0 = arith.constant 0 : i32
    return %arg0, %c0_i32 : i32, i32
  }
  func.func @transform_1(%arg0: i32) -> (i32, i32) {
    %c0_i32 = arith.constant 0 : i32
    %c0_i32_0 = arith.constant 0 : i32
    %c0_i32_1 = arith.constant 0 : i32
    return %c0_i32, %c0_i32_0 : i32, i32
  }
  func.func @transform_2(%arg0: i32) -> (i32, i32) {
    %c0_i32 = arith.constant 0 : i32
    %c0_i32_0 = arith.constant 0 : i32
    %c0_i32_1 = arith.constant 0 : i32
    return %c0_i32, %c0_i32_0 : i32, i32
  }
  func.func @transform_3(%arg0: i32) -> (i32, i32) {
    %c0_i32 = arith.constant 0 : i32
    %c0_i32_0 = arith.constant 0 : i32
    %c0_i32_1 = arith.constant 0 : i32
    return %c0_i32, %c0_i32_0 : i32, i32
  }
  func.func @transform_4(%arg0: i32) -> (i32, i32) {
    %c0_i32 = arith.constant 0 : i32
    %c0_i32_0 = arith.constant 0 : i32
    %c0_i32_1 = arith.constant 0 : i32
    return %c0_i32, %c0_i32_0 : i32, i32
  }
  func.func @transform_5(%arg0: i32) -> (i32, i32) {
    %c0_i32 = arith.constant 0 : i32
    %c0_i32_0 = arith.constant 0 : i32
    return %arg0, %c0_i32 : i32, i32
  }
}

</mosaic_0001>

<llo_original>
// kernel: tpu_custom_call.1
$region0: #{tpu_custom_call.1}
  #allocation0 [shape = 'u32[]', space=smem, size = 0x4, offset = 0x4, fixed_abs, tag = 'smem constant byte address 0x4 - core index']
  #allocation1 [shape = 'u32[144,128]{1,0:T(1,128)}', space=vmem, size = 0x12000, scoped, tag = 'internal scratch']
  %s0 = inlined_call_operand.hbm [shape: bf16[512,128], index: 0, kind: input, shape index: {}]
  %s1 = inlined_call_operand.hbm [shape: bf16[128,128], index: 1, kind: input, shape index: {}]
  %s2 = inlined_call_operand.vmem [shape: f32[1,128], index: 2, kind: input, shape index: {}]
  %s3 = inlined_call_operand.hbm [shape: bf16[128,128], index: 3, kind: input, shape index: {}]
  %s4 = inlined_call_operand.vmem [shape: f32[1,128], index: 4, kind: input, shape index: {}]
  %s5 = inlined_call_operand.hbm [shape: f32[512,128], index: 5, kind: output, shape index: {}]
  %s6 = sld [smem:[#allocation0]]
  $region65: #{tpu_custom_call.1} parent=0
    _
  %s8 = ssub.s32 1, %s6
  %s9 = scalar_select 0, %s8, %s6
  $region1: #{tpu_custom_call.1} parent=0
    #allocation2 [shape = 'u8[131072]{0}', space=vmem, size = 0x20000, scoped, tag = 'input window, operand 0']
    #allocation3 [shape = 's32[2]{0}', space=sflag, size = 0x8, scoped, tag = 'scoped memory for tpu_custom_call.1']
    #allocation4 [shape = 's32[2]{0}', space=sflag, size = 0x8, scoped, tag = 'scoped memory for tpu_custom_call.1']
    #allocation5 [shape = 'u8[32768]{0}', space=vmem, size = 0x8000, scoped, tag = 'input window, operand 1, single buffered']
    #allocation6 [shape = 's32[1]{0}', space=sflag, size = 0x4, scoped, tag = 'scoped memory for tpu_custom_call.1']
    #allocation7 [shape = 'u8[32768]{0}', space=vmem, size = 0x8000, scoped, tag = 'input window, operand 3, single buffered']
    #allocation8 [shape = 'u8[262144]{0}', space=vmem, size = 0x40000, scoped, tag = 'output window, operand 0']
    %10 = vsyncpa [#allocation3], 0
    %s11 = scalar_lea.sflag [#allocation3], 1
    %12 = vsyncpa %s11, 0
    %13 = vsyncpa [#allocation6], 0
    %14 = vsyncpa [#allocation4], 0
    %s15 = scalar_lea.sflag [#allocation4], 1
    %16 = vsyncpa %s15, 0
    loop: start=0, step=1, limit=4
    $region2: #{tpu_custom_call.1} parent=1 // loop_pre_header
      _
    $region3: #{tpu_custom_call.1} parent=1 // loop_header
      %s18 = sphi 0, %s22
      %p19 = scmp.ge.s32.totalorder %s18, 4
      %s28 = sphi 0, %s30
      %s31 = sphi 0, %s28
      %s32 = sphi 0, %s31
      %s48 = sphi 0, %s32
      %s52 = sphi 0, %s52
      %s54 = sphi 0, %s52
      %s55 = sphi 0, %s54
      %s69 = sphi 0, %s55
      %s73 = sphi 0, %s73
      %s75 = sphi 0, %s73
      %s76 = sphi 0, %s75
      %s90 = sphi 0, %s76
      %s94 = sphi 0, %s94
      %s96 = sphi 0, %s94
      %s97 = sphi 0, %s96
      %s111 = sphi 0, %s97
      %s115 = sphi 0, %s115
      %s117 = sphi 0, %s115
      %s118 = sphi 0, %s117
      %s132 = sphi 0, %s118
      %s138 = sphi 0, %s140
      %s141 = sphi 0, %s138
      %s142 = sphi 0, %s141
      %s158 = sphi 0, %s142
    $region4: #{tpu_custom_call.1} parent=1 // loop_header_branch
      %21 = sbr.rel (%p19) target = $region8
    $region5: #{tpu_custom_call.1} parent=1 // loop_body
      %s23 = ssub.s32 %s18, 1
      %s24 = ssub.s32 %s18, 2
      %s25 = sadd.s32 %s18, 1
      %s26 = ssub.s32 %s18, %s25
      %p27 = scmp.eq.s32.totalorder %s26, 0
      %s29 = sadd.s32 %s28, 1
      %s30 = scalar_select %p27, %s28, %s29
      %p33 = pneg %p27
      %p34 = scmp.eq.s32.totalorder %s18, 1
      %p35 = por %p33, %p34
      %p36 = scmp.ne.s32.totalorder %s28, %s31
      %p37 = scmp.eq.s32.totalorder %s18, 0
      %p38 = por %p36, %p37
      %p39 = scmp.ne.s32.totalorder %s28, %s31
      %p40 = scmp.eq.s32.totalorder %s23, 1
      %p41 = por %p39, %p40
      %p42 = scmp.ne.s32.totalorder %s31, %s32
      %p43 = scmp.eq.s32.totalorder %s23, 0
      %p44 = por %p42, %p43
      %p45 = scmp.ne.s32.totalorder %s31, %s32
      %p46 = scmp.eq.s32.totalorder %s24, 1
      %p47 = por %p45, %p46
      %p49 = scmp.ne.s32.totalorder %s32, %s48
      %p50 = scmp.eq.s32.totalorder %s24, 0
      %p51 = por %p49, %p50
      %s53 = sadd.s32 %s52, 1
      %p56 = scmp.eq.s32.totalorder %s18, 1
      %p57 = scmp.ne.s32.totalorder %s52, %s54
      %p58 = scmp.eq.s32.totalorder %s18, 0
      %p59 = por %p57, %p58
      %p60 = scmp.ne.s32.totalorder %s52, %s54
      %p61 = scmp.eq.s32.totalorder %s23, 1
      %p62 = por %p60, %p61
      %p63 = scmp.ne.s32.totalorder %s54, %s55
      %p64 = scmp.eq.s32.totalorder %s23, 0
      %p65 = por %p63, %p64
      %p66 = scmp.ne.s32.totalorder %s54, %s55
      %p67 = scmp.eq.s32.totalorder %s24, 1
      %p68 = por %p66, %p67
      %p70 = scmp.ne.s32.totalorder %s55, %s69
      %p71 = scmp.eq.s32.totalorder %s24, 0
      %p72 = por %p70, %p71
      %s74 = sadd.s32 %s73, 1
      %p77 = scmp.eq.s32.totalorder %s18, 1
      %p78 = scmp.ne.s32.totalorder %s73, %s75
      %p79 = scmp.eq.s32.totalorder %s18, 0
      %p80 = por %p78, %p79
      %p81 = scmp.ne.s32.totalorder %s73, %s75
      %p82 = scmp.eq.s32.totalorder %s23, 1
      %p83 = por %p81, %p82
      %p84 = scmp.ne.s32.totalorder %s75, %s76
      %p85 = scmp.eq.s32.totalorder %s23, 0
      %p86 = por %p84, %p85
      %p87 = scmp.ne.s32.totalorder %s75, %s76
      %p88 = scmp.eq.s32.totalorder %s24, 1
      %p89 = por %p87, %p88
      %p91 = scmp.ne.s32.totalorder %s76, %s90
      %p92 = scmp.eq.s32.totalorder %s24, 0
      %p93 = por %p91, %p92
      %s95 = sadd.s32 %s94, 1
      %p98 = scmp.eq.s32.totalorder %s18, 1
      %p99 = scmp.ne.s32.totalorder %s94, %s96
      %p100 = scmp.eq.s32.totalorder %s18, 0
      %p101 = por %p99, %p100
      %p102 = scmp.ne.s32.totalorder %s94, %s96
      %p103 = scmp.eq.s32.totalorder %s23, 1
      %p104 = por %p102, %p103
      %p105 = scmp.ne.s32.totalorder %s96, %s97
      %p106 = scmp.eq.s32.totalorder %s23, 0
      %p107 = por %p105, %p106
      %p108 = scmp.ne.s32.totalorder %s96, %s97
      %p109 = scmp.eq.s32.totalorder %s24, 1
      %p110 = por %p108, %p109
      %p112 = scmp.ne.s32.totalorder %s97, %s111
      %p113 = scmp.eq.s32.totalorder %s24, 0
      %p114 = por %p112, %p113
      %s116 = sadd.s32 %s115, 1
      %p119 = scmp.eq.s32.totalorder %s18, 1
      %p120 = scmp.ne.s32.totalorder %s115, %s117
      %p121 = scmp.eq.s32.totalorder %s18, 0
      %p122 = por %p120, %p121
      %p123 = scmp.ne.s32.totalorder %s115, %s117
      %p124 = scmp.eq.s32.totalorder %s23, 1
      %p125 = por %p123, %p124
      %p126 = scmp.ne.s32.totalorder %s117, %s118
      %p127 = scmp.eq.s32.totalorder %s23, 0
      %p128 = por %p126, %p127
      %p129 = scmp.ne.s32.totalorder %s117, %s118
      %p130 = scmp.eq.s32.totalorder %s24, 1
      %p131 = por %p129, %p130
      %p133 = scmp.ne.s32.totalorder %s118, %s132
      %p134 = scmp.eq.s32.totalorder %s24, 0
      %p135 = por %p133, %p134
      %s136 = ssub.s32 %s18, %s25
      %p137 = scmp.eq.s32.totalorder %s136, 0
      %s139 = sadd.s32 %s138, 1
      %s140 = scalar_select %p137, %s138, %s139
      %p143 = pneg %p137
      %p144 = scmp.eq.s32.totalorder %s18, 1
      %p145 = por %p143, %p144
      %p146 = scmp.ne.s32.totalorder %s138, %s141
      %p147 = scmp.eq.s32.totalorder %s18, 0
      %p148 = por %p146, %p147
      %p149 = scmp.ne.s32.totalorder %s138, %s141
      %p150 = scmp.eq.s32.totalorder %s23, 1
      %p151 = por %p149, %p150
      %p152 = scmp.ne.s32.totalorder %s141, %s142
      %p153 = scmp.eq.s32.totalorder %s23, 0
      %p154 = por %p152, %p153
      %p155 = scmp.ne.s32.totalorder %s141, %s142
      %p156 = scmp.eq.s32.totalorder %s24, 1
      %p157 = por %p155, %p156
      %p159 = scmp.ne.s32.totalorder %s142, %s158
      %p160 = scmp.eq.s32.totalorder %s24, 0
      %p161 = por %p159, %p160
      %p162 = scmp.le.s32.totalorder 1, %s18
      %p163 = scmp.lt.s32.totalorder %s18, 3
      %p164 = pnand %p162, %p163
      %p165 = pneg %p164
      // Predicated region
      $region9: #{tpu_custom_call.1} parent=5 // pred_check
        _
      $region10: #{tpu_custom_call.1} parent=5 // pred_check_branch
        %167 = sbr.rel (%p164) target = $region12
      $region11: #{tpu_custom_call.1} parent=5 // pred_region
        %s168 = ssub.s32 %s18, 1
        // Predicated region
        $region13: #{tpu_custom_call.1} parent=11 // pred_check
          %p169 = pneg %p65
        $region14: #{tpu_custom_call.1} parent=11 // pred_check_branch
          %171 = sbr.rel (%p169) target = $region16
        $region15: #{tpu_custom_call.1} parent=11 // pred_region
          %s173 = ssub.s32 1024, 1024
          %174 = vsyncadd [#allocation6], %s173
          %s175 = sshll.u32 [#allocation5], 4
          %s176 = int_to_ptr.vmem [resolvable:$true] %s175
          %181 = dma.hbm_to_vmem [thread:$0]  %s1, 1024, %s176, [#allocation6], 64, 64, 4
        $region16: #{tpu_custom_call.1} parent=11 // pred_fallthru
          _
        // Predicated region
        $region17: #{tpu_custom_call.1} parent=11 // pred_check
          %p182 = pneg %p86
        $region18: #{tpu_custom_call.1} parent=11 // pred_check_branch
          %184 = sbr.rel (%p182) target = $region20
        $region19: #{tpu_custom_call.1} parent=11 // pred_region
          _
        $region20: #{tpu_custom_call.1} parent=11 // pred_fallthru
          _
        // Predicated region
        $region21: #{tpu_custom_call.1} parent=11 // pred_check
          %p185 = pneg %p107
        $region22: #{tpu_custom_call.1} parent=11 // pred_check_branch
          %187 = sbr.rel (%p185) target = $region24
        $region23: #{tpu_custom_call.1} parent=11 // pred_region
          %s189 = ssub.s32 1024, 1024
          %190 = vsyncadd [#allocation6], %s189
          %s191 = sshll.u32 [#allocation7], 4
          %s192 = int_to_ptr.vmem [resolvable:$true] %s191
          %197 = dma.hbm_to_vmem [thread:$0]  %s3, 1024, %s192, [#allocation6], 64, 64, 4
        $region24: #{tpu_custom_call.1} parent=11 // pred_fallthru
          _
        // Predicated region
        $region25: #{tpu_custom_call.1} parent=11 // pred_check
          %p198 = pneg %p128
        $region26: #{tpu_custom_call.1} parent=11 // pred_check_branch
          %200 = sbr.rel (%p198) target = $region28
        $region27: #{tpu_custom_call.1} parent=11 // pred_region
          _
        $region28: #{tpu_custom_call.1} parent=11 // pred_fallthru
          _
      $region12: #{tpu_custom_call.1} parent=5 // pred_fallthru
        _
      %p201 = scmp.lt.s32.totalorder %s18, 2
      // Predicated region
      $region29: #{tpu_custom_call.1} parent=5 // pred_check
        %p202 = pneg %p201
      $region30: #{tpu_custom_call.1} parent=5 // pred_check_branch
        %204 = sbr.rel (%p202) target = $region32
      $region31: #{tpu_custom_call.1} parent=5 // pred_region
        // Predicated region
        $region33: #{tpu_custom_call.1} parent=31 // pred_check
          %p205 = pneg %p38
        $region34: #{tpu_custom_call.1} parent=31 // pred_check_branch
          %207 = sbr.rel (%p205) target = $region36
        $region35: #{tpu_custom_call.1} parent=31 // pred_region
          %s208 = sand.u32 %s28, 1
          %s209 = scalar_lea.sflag [#allocation3], %s208
          %s210 = sand.u32 %s28, 1
          %s211 = smul.addr %s210, 128
          %s212 = scalar_lea.vmem [#allocation2], %s211
          %s213 = smul.u32 32, %s18
          %s215 = ssub.s32 2048, 2048
          %216 = vsyncadd %s209, %s215
          %s217 = smul.addr %s213, 64
          %s218 = scalar_lea.hbm %s0, %s217
          %s219 = sshll.u32 %s212, 4
          %s220 = int_to_ptr.vmem [resolvable:$true] %s219
          %225 = dma.hbm_to_vmem [thread:$0]  %s218, 2048, %s220, %s209, 64, 64, 4
        $region36: #{tpu_custom_call.1} parent=31 // pred_fallthru
          _
      $region32: #{tpu_custom_call.1} parent=5 // pred_fallthru
        _
      %p226 = scmp.le.s32.totalorder 1, %s18
      %p227 = scmp.lt.s32.totalorder %s18, 3
      %p228 = pnand %p226, %p227
      %p229 = pneg %p228
      // Predicated region
      $region37: #{tpu_custom_call.1} parent=5 // pred_check
        _
      $region38: #{tpu_custom_call.1} parent=5 // pred_check_branch
        %231 = sbr.rel (%p228) target = $region40
      $region39: #{tpu_custom_call.1} parent=5 // pred_region
        %s232 = ssub.s32 %s18, 1
        %s233 = sand.u32 %s31, 1
        %s234 = scalar_lea.sflag [#allocation3], %s233
        %s235 = sand.u32 %s31, 1
        %s236 = smul.addr %s235, 128
        %s237 = scalar_lea.vmem [#allocation2], %s236
        // Predicated region
        $region41: #{tpu_custom_call.1} parent=39 // pred_check
          %p238 = pneg %p44
        $region42: #{tpu_custom_call.1} parent=39 // pred_check_branch
          %240 = sbr.rel (%p238) target = $region44
        $region43: #{tpu_custom_call.1} parent=39 // pred_region
          %241 = dma.done %s234, 2048
        $region44: #{tpu_custom_call.1} parent=39 // pred_fallthru
          _
        // Predicated region
        $region45: #{tpu_custom_call.1} parent=39 // pred_check
          %p242 = pneg %p65
        $region46: #{tpu_custom_call.1} parent=39 // pred_check_branch
          %244 = sbr.rel (%p242) target = $region48
        $region47: #{tpu_custom_call.1} parent=39 // pred_region
          %245 = dma.done [#allocation6], 1024
        $region48: #{tpu_custom_call.1} parent=39 // pred_fallthru
          _
        // Predicated region
        $region49: #{tpu_custom_call.1} parent=39 // pred_check
          %p246 = pneg %p107
        $region50: #{tpu_custom_call.1} parent=39 // pred_check_branch
          %248 = sbr.rel (%p246) target = $region52
        $region51: #{tpu_custom_call.1} parent=39 // pred_region
          %249 = dma.done [#allocation6], 1024
        $region52: #{tpu_custom_call.1} parent=39 // pred_fallthru
          _
        %s250 = sand.u32 %s31, 1
        %s251 = scalar_lea.sflag [#allocation3], %s250
        %s252 = sand.u32 %s31, 1
        %s253 = smul.addr %s252, 128
        %s254 = scalar_lea.vmem [#allocation2], %s253
        %p255 = pneg %p44
        %p256 = pneg %p41
        %p257 = pneg %p65
        %p258 = pneg %p62
        %p259 = pneg %p86
        %p260 = pneg %p83
        %p261 = pneg %p107
        %p262 = pneg %p104
        %p263 = pneg %p128
        %p264 = pneg %p125
        %p265 = pneg %p154
        %p266 = pneg %p151
        %s267 = sand.u32 %s141, 1
        %s268 = scalar_lea.sflag [#allocation4], %s267
        %s269 = sand.u32 %s141, 1
        %s270 = smul.addr %s269, 256
        %s271 = scalar_lea.vmem [#allocation8], %s270
        %s272 = smul.u32 32, %s23
        %s273 = smul.u32 32, %s23
        %v275 = vld [vmem:[#allocation5] sm:$0xf]
        %v276 = vld [vmem:[#allocation5 + $0x4] sm:$0xf]
        %v277 = vld [vmem:[#allocation5 + $0x8] sm:$0xf]
        %v278 = vld [vmem:[#allocation5 + $0xc] sm:$0xf]
        %v279 = vld [vmem:[#allocation5 + $0x10] sm:$0xf]
        %v280 = vld [vmem:[#allocation5 + $0x14] sm:$0xf]
        %v281 = vld [vmem:[#allocation5 + $0x18] sm:$0xf]
        %v282 = vld [vmem:[#allocation5 + $0x1c] sm:$0xf]
        %v283 = vld [vmem:[#allocation5 + $0x20] sm:$0xf]
        %v284 = vld [vmem:[#allocation5 + $0x24] sm:$0xf]
        %v285 = vld [vmem:[#allocation5 + $0x28] sm:$0xf]
        %v286 = vld [vmem:[#allocation5 + $0x2c] sm:$0xf]
        %v287 = vld [vmem:[#allocation5 + $0x30] sm:$0xf]
        %v288 = vld [vmem:[#allocation5 + $0x34] sm:$0xf]
        %v289 = vld [vmem:[#allocation5 + $0x38] sm:$0xf]
        %v290 = vld [vmem:[#allocation5 + $0x3c] sm:$0xf]
        %v291 = vld [vmem:[%s2] sm:$0x1]
        %v292 = vld [vmem:[#allocation7] sm:$0xf]
        %v293 = vld [vmem:[#allocation7 + $0x4] sm:$0xf]
        %v294 = vld [vmem:[#allocation7 + $0x8] sm:$0xf]
        %v295 = vld [vmem:[#allocation7 + $0xc] sm:$0xf]
        %v296 = vld [vmem:[#allocation7 + $0x10] sm:$0xf]
        %v297 = vld [vmem:[#allocation7 + $0x14] sm:$0xf]
        %v298 = vld [vmem:[#allocation7 + $0x18] sm:$0xf]
        %v299 = vld [vmem:[#allocation7 + $0x1c] sm:$0xf]
        %v300 = vld [vmem:[#allocation7 + $0x20] sm:$0xf]
        %v301 = vld [vmem:[#allocation7 + $0x24] sm:$0xf]
        %v302 = vld [vmem:[#allocation7 + $0x28] sm:$0xf]
        %v303 = vld [vmem:[#allocation7 + $0x2c] sm:$0xf]
        %v304 = vld [vmem:[#allocation7 + $0x30] sm:$0xf]
        %v305 = vld [vmem:[#allocation7 + $0x34] sm:$0xf]
        %v306 = vld [vmem:[#allocation7 + $0x38] sm:$0xf]
        %v307 = vld [vmem:[#allocation7 + $0x3c] sm:$0xf]
        %v308 = vld [vmem:[%s4] sm:$0x1]
        %v309 = vld [vmem:[%s237] sm:$0xf]
        %v310 = vld [vmem:[%s237 + $0x4] sm:$0xf]
        %v311 = vld [vmem:[%s237 + $0x8] sm:$0xf]
        %v312 = vld [vmem:[%s237 + $0xc] sm:$0xf]
        %v313 = vld [vmem:[%s237 + $0x10] sm:$0xf]
        %v314 = vld [vmem:[%s237 + $0x14] sm:$0xf]
        %v315 = vld [vmem:[%s237 + $0x18] sm:$0xf]
        %v316 = vld [vmem:[%s237 + $0x1c] sm:$0xf]
        %v317 = vld [vmem:[%s237 + $0x20] sm:$0xf]
        %v318 = vld [vmem:[%s237 + $0x24] sm:$0xf]
        %v319 = vld [vmem:[%s237 + $0x28] sm:$0xf]
        %v320 = vld [vmem:[%s237 + $0x2c] sm:$0xf]
        %v321 = vld [vmem:[%s237 + $0x30] sm:$0xf]
        %v322 = vld [vmem:[%s237 + $0x34] sm:$0xf]
        %v323 = vld [vmem:[%s237 + $0x38] sm:$0xf]
        %v324 = vld [vmem:[%s237 + $0x3c] sm:$0xf]
        %v326 = vlaneseq
        %v327 = vshrl.u32 %v326, 7
        %v328 = vsub.s32 0, %v327
        %v329 = vrot.slane %v291, %v328
        %v347 = vunpack.c.l.b16 %v309
        %v348 = vunpack.c.l.b16 %v310
        %v349 = vunpack.c.l.b16 %v311
        %v350 = vunpack.c.l.b16 %v312
        %v351 = vunpack.c.l.b16 %v313
        %v352 = vunpack.c.l.b16 %v314
        %v353 = vunpack.c.l.b16 %v315
        %v354 = vunpack.c.l.b16 %v316
        %v355 = vunpack.c.l.b16 %v317
        %v356 = vunpack.c.l.b16 %v318
        %v357 = vunpack.c.l.b16 %v319
        %v358 = vunpack.c.l.b16 %v320
        %v359 = vunpack.c.l.b16 %v321
        %v360 = vunpack.c.l.b16 %v322
        %v361 = vunpack.c.l.b16 %v323
        %v362 = vunpack.c.l.b16 %v324
        %v363 = vpack.c.b16 %v348, %v347
        %v364 = vpack.c.b16 %v350, %v349
        %v365 = vpack.c.b16 %v352, %v351
        %v366 = vpack.c.b16 %v354, %v353
        %v367 = vpack.c.b16 %v356, %v355
        %v368 = vpack.c.b16 %v358, %v357
        %v369 = vpack.c.b16 %v360, %v359
        %v370 = vpack.c.b16 %v362, %v361
        %v395 = vunpack.c.l.b16 %v275
        %v396 = vunpack.c.l.b16 %v276
        %v397 = vunpack.c.l.b16 %v277
        %v398 = vunpack.c.l.b16 %v278
        %v399 = vunpack.c.l.b16 %v279
        %v400 = vunpack.c.l.b16 %v280
        %v401 = vunpack.c.l.b16 %v281
        %v402 = vunpack.c.l.b16 %v282
        %v403 = vunpack.c.l.b16 %v283
        %v404 = vunpack.c.l.b16 %v284
        %v405 = vunpack.c.l.b16 %v285
        %v406 = vunpack.c.l.b16 %v286
        %v407 = vunpack.c.l.b16 %v287
        %v408 = vunpack.c.l.b16 %v288
        %v409 = vunpack.c.l.b16 %v289
        %v410 = vunpack.c.l.b16 %v290
        %v411 = vpack.c.b16 %v396, %v395
        %v412 = vpack.c.b16 %v398, %v397
        %v413 = vpack.c.b16 %v400, %v399
        %v414 = vpack.c.b16 %v402, %v401
        %v415 = vpack.c.b16 %v404, %v403
        %v416 = vpack.c.b16 %v406, %v405
        %v417 = vpack.c.b16 %v408, %v407
        %v418 = vpack.c.b16 %v410, %v409
        %427 = vmatprep.subr.bf16.mxu0 0
        %428 = vmatpush1.bf16.msra.mxu0 %v411
        %429 = vmatprep.subr.bf16.mxu0 0
        %430 = vmatpush1.bf16.msra.mxu0 %v412
        %431 = vmatprep.subr.bf16.mxu0 0
        %432 = vmatpush1.bf16.msra.mxu0 %v413
        %433 = vmatprep.subr.bf16.mxu0 0
        %434 = vmatpush1.bf16.msra.mxu0 %v414
        %435 = vmatprep.subr.bf16.mxu0 0
        %436 = vmatpush1.bf16.msra.mxu0 %v415
        %437 = vmatprep.subr.bf16.mxu0 0
        %438 = vmatpush1.bf16.msra.mxu0 %v416
        %439 = vmatprep.subr.bf16.mxu0 0
        %440 = vmatpush1.bf16.msra.mxu0 %v417
        %441 = vmatprep.subr.bf16.mxu0 0
        %442 = vmatpush1.bf16.msra.mxu0 %v418
        %443 = vmatprep.subr.bf16.mxu0 0
        %444 = vmatpush1.bf16.msra.mxu0 0
        %445 = vmatprep.subr.bf16.mxu0 0
        %446 = vmatpush1.bf16.msra.mxu0 0
        %447 = vmatprep.subr.bf16.mxu0 0
        %448 = vmatpush1.bf16.msra.mxu0 0
        %449 = vmatprep.subr.bf16.mxu0 0
        %450 = vmatpush1.bf16.msra.mxu0 0
        %451 = vmatprep.subr.bf16.mxu0 0
        %452 = vmatpush1.bf16.msra.mxu0 0
        %453 = vmatprep.subr.bf16.mxu0 0
        %454 = vmatpush1.bf16.msra.mxu0 0
        %455 = vmatprep.subr.bf16.mxu0 0
        %456 = vmatpush1.bf16.msra.mxu0 0
        %457 = vmatprep.subr.bf16.mxu0 0
        %458 = vmatpush1.bf16.msra.mxu0 0
        %459 = vmatprep.mubr.bf16.mxu0 0
        %460 = vmatmul.mubr.bf16.gmra.mrb[0].mxu0 %v363
        %v461 = vpop.f32.mrb[0].mxu0
        %v462 = vadd.f32 %v329, %v461
        %v463 = vpop.f32.mrb[0].mxu0
        %v464 = vpop.f32.mrb[0].mxu0
        %v465 = vadd.f32 %v329, %v464
        %v466 = vpop.f32.mrb[0].mxu0
        %467 = vmatprep.mubr.bf16.mxu0 0
        %468 = vmatmul.mubr.bf16.gmra.mrb[0].mxu0 %v364
        %v469 = vpop.f32.mrb[0].mxu0
        %v470 = vadd.f32 %v329, %v469
        %v471 = vpop.f32.mrb[0].mxu0
        %v472 = vpop.f32.mrb[0].mxu0
        %v473 = vadd.f32 %v329, %v472
        %v474 = vpop.f32.mrb[0].mxu0
        %475 = vmatprep.mubr.bf16.mxu0 0
        %476 = vmatmul.mubr.bf16.gmra.mrb[0].mxu0 %v365
        %v477 = vpop.f32.mrb[0].mxu0
        %v478 = vadd.f32 %v329, %v477
        %v479 = vpop.f32.mrb[0].mxu0
        %v480 = vpop.f32.mrb[0].mxu0
        %v481 = vadd.f32 %v329, %v480
        %v482 = vpop.f32.mrb[0].mxu0
        %483 = vmatprep.mubr.bf16.mxu0 0
        %484 = vmatmul.mubr.bf16.gmra.mrb[0].mxu0 %v366
        %v485 = vpop.f32.mrb[0].mxu0
        %v486 = vadd.f32 %v329, %v485
        %v487 = vpop.f32.mrb[0].mxu0
        %v488 = vpop.f32.mrb[0].mxu0
        %v489 = vadd.f32 %v329, %v488
        %v490 = vpop.f32.mrb[0].mxu0
        %491 = vmatprep.mubr.bf16.mxu0 0
        %492 = vmatmul.mubr.bf16.gmra.mrb[0].mxu0 %v367
        %v493 = vpop.f32.mrb[0].mxu0
        %v494 = vadd.f32 %v329, %v493
        %v495 = vpop.f32.mrb[0].mxu0
        %v496 = vpop.f32.mrb[0].mxu0
        %v497 = vadd.f32 %v329, %v496
        %v498 = vpop.f32.mrb[0].mxu0
        %499 = vmatprep.mubr.bf16.mxu0 0
        %500 = vmatmul.mubr.bf16.gmra.mrb[0].mxu0 %v368
        %v501 = vpop.f32.mrb[0].mxu0
        %v502 = vadd.f32 %v329, %v501
        %v503 = vpop.f32.mrb[0].mxu0
        %v504 = vpop.f32.mrb[0].mxu0
        %v505 = vadd.f32 %v329, %v504
        %v506 = vpop.f32.mrb[0].mxu0
        %507 = vmatprep.mubr.bf16.mxu0 0
        %508 = vmatmul.mubr.bf16.gmra.mrb[0].mxu0 %v369
        %v509 = vpop.f32.mrb[0].mxu0
        %v510 = vadd.f32 %v329, %v509
        %v511 = vpop.f32.mrb[0].mxu0
        %v512 = vpop.f32.mrb[0].mxu0
        %v513 = vadd.f32 %v329, %v512
        %v514 = vpop.f32.mrb[0].mxu0
        %515 = vmatprep.mubr.bf16.mxu0 0
        %516 = vmatmul.mubr.bf16.gmra.mrb[0].mxu0 %v370
        %v517 = vpop.f32.mrb[0].mxu0
        %v518 = vadd.f32 %v329, %v517
        %v519 = vpop.f32.mrb[0].mxu0
        %v520 = vpop.f32.mrb[0].mxu0
        %v521 = vadd.f32 %v329, %v520
        %v522 = vpop.f32.mrb[0].mxu0
        %523 = vdwg.mxu0
        %v524 = vpack.c.bf16 %v465, %v462
        %v525 = vpack.c.bf16 %v473, %v470
        %v526 = vpack.c.bf16 %v481, %v478
        %v527 = vpack.c.bf16 %v489, %v486
        %v528 = vpack.c.bf16 %v497, %v494
        %v529 = vpack.c.bf16 %v505, %v502
        %v530 = vpack.c.bf16 %v513, %v510
        %v531 = vpack.c.bf16 %v521, %v518
        %v533 = vlaneseq
        %v534 = vshrl.u32 %v533, 7
        %v535 = vsub.s32 0, %v534
        %v536 = vrot.slane %v308, %v535
        %v554 = vunpack.c.l.b16 %v292
        %v555 = vunpack.c.l.b16 %v293
        %v556 = vunpack.c.l.b16 %v294
        %v557 = vunpack.c.l.b16 %v295
        %v558 = vunpack.c.l.b16 %v296
        %v559 = vunpack.c.l.b16 %v297
        %v560 = vunpack.c.l.b16 %v298
        %v561 = vunpack.c.l.b16 %v299
        %v562 = vunpack.c.l.b16 %v300
        %v563 = vunpack.c.l.b16 %v301
        %v564 = vunpack.c.l.b16 %v302
        %v565 = vunpack.c.l.b16 %v303
        %v566 = vunpack.c.l.b16 %v304
        %v567 = vunpack.c.l.b16 %v305
        %v568 = vunpack.c.l.b16 %v306
        %v569 = vunpack.c.l.b16 %v307
        %v570 = vpack.c.b16 %v555, %v554
        %v571 = vpack.c.b16 %v557, %v556
        %v572 = vpack.c.b16 %v559, %v558
        %v573 = vpack.c.b16 %v561, %v560
        %v574 = vpack.c.b16 %v563, %v562
        %v575 = vpack.c.b16 %v565, %v564
        %v576 = vpack.c.b16 %v567, %v566
        %v577 = vpack.c.b16 %v569, %v568
        %586 = vmatprep.subr.bf16.mxu0 0
        %587 = vmatpush1.bf16.msra.mxu0 %v570
        %588 = vmatprep.subr.bf16.mxu0 0
        %589 = vmatpush1.bf16.msra.mxu0 %v571
        %590 = vmatprep.subr.bf16.mxu0 0
        %591 = vmatpush1.bf16.msra.mxu0 %v572
        %592 = vmatprep.subr.bf16.mxu0 0
        %593 = vmatpush1.bf16.msra.mxu0 %v573
        %594 = vmatprep.subr.bf16.mxu0 0
        %595 = vmatpush1.bf16.msra.mxu0 %v574
        %596 = vmatprep.subr.bf16.mxu0 0
        %597 = vmatpush1.bf16.msra.mxu0 %v575
        %598 = vmatprep.subr.bf16.mxu0 0
        %599 = vmatpush1.bf16.msra.mxu0 %v576
        %600 = vmatprep.subr.bf16.mxu0 0
        %601 = vmatpush1.bf16.msra.mxu0 %v577
        %602 = vmatprep.subr.bf16.mxu0 0
        %603 = vmatpush1.bf16.msra.mxu0 0
        %604 = vmatprep.subr.bf16.mxu0 0
        %605 = vmatpush1.bf16.msra.mxu0 0
        %606 = vmatprep.subr.bf16.mxu0 0
        %607 = vmatpush1.bf16.msra.mxu0 0
        %608 = vmatprep.subr.bf16.mxu0 0
        %609 = vmatpush1.bf16.msra.mxu0 0
        %610 = vmatprep.subr.bf16.mxu0 0
        %611 = vmatpush1.bf16.msra.mxu0 0
        %612 = vmatprep.subr.bf16.mxu0 0
        %613 = vmatpush1.bf16.msra.mxu0 0
        %614 = vmatprep.subr.bf16.mxu0 0
        %615 = vmatpush1.bf16.msra.mxu0 0
        %616 = vmatprep.subr.bf16.mxu0 0
        %617 = vmatpush1.bf16.msra.mxu0 0
        %618 = vmatprep.mubr.bf16.mxu0 0
        %619 = vmatmul.mubr.bf16.gmra.mrb[0].mxu0 %v524
        %v620 = vpop.f32.mrb[0].mxu0
        %v621 = vadd.f32 %v536, %v620
        %v622 = vpop.f32.mrb[0].mxu0
        %v623 = vpop.f32.mrb[0].mxu0
        %v624 = vadd.f32 %v536, %v623
        %v625 = vpop.f32.mrb[0].mxu0
        %626 = vmatprep.mubr.bf16.mxu0 0
        %627 = vmatmul.mubr.bf16.gmra.mrb[0].mxu0 %v525
        %v628 = vpop.f32.mrb[0].mxu0
        %v629 = vadd.f32 %v536, %v628
        %v630 = vpop.f32.mrb[0].mxu0
        %v631 = vpop.f32.mrb[0].mxu0
        %v632 = vadd.f32 %v536, %v631
        %v633 = vpop.f32.mrb[0].mxu0
        %634 = vmatprep.mubr.bf16.mxu0 0
        %635 = vmatmul.mubr.bf16.gmra.mrb[0].mxu0 %v526
        %v636 = vpop.f32.mrb[0].mxu0
        %v637 = vadd.f32 %v536, %v636
        %v638 = vpop.f32.mrb[0].mxu0
        %v639 = vpop.f32.mrb[0].mxu0
        %v640 = vadd.f32 %v536, %v639
        %v641 = vpop.f32.mrb[0].mxu0
        %642 = vmatprep.mubr.bf16.mxu0 0
        %643 = vmatmul.mubr.bf16.gmra.mrb[0].mxu0 %v527
        %v644 = vpop.f32.mrb[0].mxu0
        %v645 = vadd.f32 %v536, %v644
        %v646 = vpop.f32.mrb[0].mxu0
        %v647 = vpop.f32.mrb[0].mxu0
        %v648 = vadd.f32 %v536, %v647
        %v649 = vpop.f32.mrb[0].mxu0
        %650 = vmatprep.mubr.bf16.mxu0 0
        %651 = vmatmul.mubr.bf16.gmra.mrb[0].mxu0 %v528
        %v652 = vpop.f32.mrb[0].mxu0
        %v653 = vadd.f32 %v536, %v652
        %v654 = vpop.f32.mrb[0].mxu0
        %v655 = vpop.f32.mrb[0].mxu0
        %v656 = vadd.f32 %v536, %v655
        %v657 = vpop.f32.mrb[0].mxu0
        %658 = vmatprep.mubr.bf16.mxu0 0
        %659 = vmatmul.mubr.bf16.gmra.mrb[0].mxu0 %v529
        %v660 = vpop.f32.mrb[0].mxu0
        %v661 = vadd.f32 %v536, %v660
        %v662 = vpop.f32.mrb[0].mxu0
        %v663 = vpop.f32.mrb[0].mxu0
        %v664 = vadd.f32 %v536, %v663
        %v665 = vpop.f32.mrb[0].mxu0
        %666 = vmatprep.mubr.bf16.mxu0 0
        %667 = vmatmul.mubr.bf16.gmra.mrb[0].mxu0 %v530
        %v668 = vpop.f32.mrb[0].mxu0
        %v669 = vadd.f32 %v536, %v668
        %v670 = vpop.f32.mrb[0].mxu0
        %v671 = vpop.f32.mrb[0].mxu0
        %v672 = vadd.f32 %v536, %v671
        %v673 = vpop.f32.mrb[0].mxu0
        %674 = vmatprep.mubr.bf16.mxu0 0
        %675 = vmatmul.mubr.bf16.gmra.mrb[0].mxu0 %v531
        %v676 = vpop.f32.mrb[0].mxu0
        %v677 = vadd.f32 %v536, %v676
        %v678 = vpop.f32.mrb[0].mxu0
        %v679 = vpop.f32.mrb[0].mxu0
        %v680 = vadd.f32 %v536, %v679
        %v681 = vpop.f32.mrb[0].mxu0
        %682 = vdwg.mxu0
        %683 = vmax.xlane.f32.xlu0 %v621
        %v684 = vpop.xlane.xlu0 %683
        %685 = vmax.xlane.f32.xlu0 %v624
        %v686 = vpop.xlane.xlu0 %685
        %687 = vmax.xlane.f32.xlu0 %v629
        %v688 = vpop.xlane.xlu0 %687
        %689 = vmax.xlane.f32.xlu0 %v632
        %v690 = vpop.xlane.xlu0 %689
        %691 = vmax.xlane.f32.xlu0 %v637
        %v692 = vpop.xlane.xlu0 %691
        %693 = vmax.xlane.f32.xlu0 %v640
        %v694 = vpop.xlane.xlu0 %693
        %695 = vmax.xlane.f32.xlu0 %v645
        %v696 = vpop.xlane.xlu0 %695
        %697 = vmax.xlane.f32.xlu0 %v648
        %v698 = vpop.xlane.xlu0 %697
        %699 = vmax.xlane.f32.xlu0 %v653
        %v700 = vpop.xlane.xlu0 %699
        %701 = vmax.xlane.f32.xlu0 %v656
        %v702 = vpop.xlane.xlu0 %701
        %703 = vmax.xlane.f32.xlu0 %v661
        %v704 = vpop.xlane.xlu0 %703
        %705 = vmax.xlane.f32.xlu0 %v664
        %v706 = vpop.xlane.xlu0 %705
        %707 = vmax.xlane.f32.xlu0 %v669
        %v708 = vpop.xlane.xlu0 %707
        %709 = vmax.xlane.f32.xlu0 %v672
        %v710 = vpop.xlane.xlu0 %709
        %711 = vmax.xlane.f32.xlu0 %v677
        %v712 = vpop.xlane.xlu0 %711
        %713 = vmax.xlane.f32.xlu0 %v680
        %v714 = vpop.xlane.xlu0 %713
        %v715 = vsub.f32 %v621, %v684
        %v716 = vsub.f32 %v624, %v686
        %v717 = vsub.f32 %v629, %v688
        %v718 = vsub.f32 %v632, %v690
        %v719 = vsub.f32 %v637, %v692
        %v720 = vsub.f32 %v640, %v694
        %v721 = vsub.f32 %v645, %v696
        %v722 = vsub.f32 %v648, %v698
        %v723 = vsub.f32 %v653, %v700
        %v724 = vsub.f32 %v656, %v702
        %v725 = vsub.f32 %v661, %v704
        %v726 = vsub.f32 %v664, %v706
        %v727 = vsub.f32 %v669, %v708
        %v728 = vsub.f32 %v672, %v710
        %v729 = vsub.f32 %v677, %v712
        %v730 = vsub.f32 %v680, %v714
        %v731 = vmul.f32 %v715, 1.442695
        %v732 = vpow.pop %v731
        %v733 = vmul.f32 %v716, 1.442695
        %v734 = vpow.pop %v733
        %v735 = vmul.f32 %v717, 1.442695
        %v736 = vpow.pop %v735
        %v737 = vmul.f32 %v718, 1.442695
        %v738 = vpow.pop %v737
        %v739 = vmul.f32 %v719, 1.442695
        %v740 = vpow.pop %v739
        %v741 = vmul.f32 %v720, 1.442695
        %v742 = vpow.pop %v741
        %v743 = vmul.f32 %v721, 1.442695
        %v744 = vpow.pop %v743
        %v745 = vmul.f32 %v722, 1.442695
        %v746 = vpow.pop %v745
        %v747 = vmul.f32 %v723, 1.442695
        %v748 = vpow.pop %v747
        %v749 = vmul.f32 %v724, 1.442695
        %v750 = vpow.pop %v749
        %v751 = vmul.f32 %v725, 1.442695
        %v752 = vpow.pop %v751
        %v753 = vmul.f32 %v726, 1.442695
        %v754 = vpow.pop %v753
        %v755 = vmul.f32 %v727, 1.442695
        %v756 = vpow.pop %v755
        %v757 = vmul.f32 %v728, 1.442695
        %v758 = vpow.pop %v757
        %v759 = vmul.f32 %v729, 1.442695
        %v760 = vpow.pop %v759
        %v761 = vmul.f32 %v730, 1.442695
        %v762 = vpow.pop %v761
        %763 = vadd.xlane.f32.xlu0 %v732
        %v764 = vpop.xlane.xlu0 %763
        %765 = vadd.xlane.f32.xlu0 %v734
        %v766 = vpop.xlane.xlu0 %765
        %767 = vadd.xlane.f32.xlu0 %v736
        %v768 = vpop.xlane.xlu0 %767
        %769 = vadd.xlane.f32.xlu0 %v738
        %v770 = vpop.xlane.xlu0 %769
        %771 = vadd.xlane.f32.xlu0 %v740
        %v772 = vpop.xlane.xlu0 %771
        %773 = vadd.xlane.f32.xlu0 %v742
        %v774 = vpop.xlane.xlu0 %773
        %775 = vadd.xlane.f32.xlu0 %v744
        %v776 = vpop.xlane.xlu0 %775
        %777 = vadd.xlane.f32.xlu0 %v746
        %v778 = vpop.xlane.xlu0 %777
        %779 = vadd.xlane.f32.xlu0 %v748
        %v780 = vpop.xlane.xlu0 %779
        %781 = vadd.xlane.f32.xlu0 %v750
        %v782 = vpop.xlane.xlu0 %781
        %783 = vadd.xlane.f32.xlu0 %v752
        %v784 = vpop.xlane.xlu0 %783
        %785 = vadd.xlane.f32.xlu0 %v754
        %v786 = vpop.xlane.xlu0 %785
        %787 = vadd.xlane.f32.xlu0 %v756
        %v788 = vpop.xlane.xlu0 %787
        %789 = vadd.xlane.f32.xlu0 %v758
        %v790 = vpop.xlane.xlu0 %789
        %791 = vadd.xlane.f32.xlu0 %v760
        %v792 = vpop.xlane.xlu0 %791
        %793 = vadd.xlane.f32.xlu0 %v762
        %v794 = vpop.xlane.xlu0 %793
        %v795 = vlog2.pop %v764
        %v796 = vmul.f32 %v795, 0.6931472
        %v797 = vlog2.pop %v766
        %v798 = vmul.f32 %v797, 0.6931472
        %v799 = vlog2.pop %v768
        %v800 = vmul.f32 %v799, 0.6931472
        %v801 = vlog2.pop %v770
        %v802 = vmul.f32 %v801, 0.6931472
        %v803 = vlog2.pop %v772
        %v804 = vmul.f32 %v803, 0.6931472
        %v805 = vlog2.pop %v774
        %v806 = vmul.f32 %v805, 0.6931472
        %v807 = vlog2.pop %v776
        %v808 = vmul.f32 %v807, 0.6931472
        %v809 = vlog2.pop %v778
        %v810 = vmul.f32 %v809, 0.6931472
        %v811 = vlog2.pop %v780
        %v812 = vmul.f32 %v811, 0.6931472
        %v813 = vlog2.pop %v782
        %v814 = vmul.f32 %v813, 0.6931472
        %v815 = vlog2.pop %v784
        %v816 = vmul.f32 %v815, 0.6931472
        %v817 = vlog2.pop %v786
        %v818 = vmul.f32 %v817, 0.6931472
        %v819 = vlog2.pop %v788
        %v820 = vmul.f32 %v819, 0.6931472
        %v821 = vlog2.pop %v790
        %v822 = vmul.f32 %v821, 0.6931472
        %v823 = vlog2.pop %v792
        %v824 = vmul.f32 %v823, 0.6931472
        %v825 = vlog2.pop %v794
        %v826 = vmul.f32 %v825, 0.6931472
        %v827 = vsub.f32 %v715, %v796
        %v828 = vsub.f32 %v716, %v798
        %v829 = vsub.f32 %v717, %v800
        %v830 = vsub.f32 %v718, %v802
        %v831 = vsub.f32 %v719, %v804
        %v832 = vsub.f32 %v720, %v806
        %v833 = vsub.f32 %v721, %v808
        %v834 = vsub.f32 %v722, %v810
        %v835 = vsub.f32 %v723, %v812
        %v836 = vsub.f32 %v724, %v814
        %v837 = vsub.f32 %v725, %v816
        %v838 = vsub.f32 %v726, %v818
        %v839 = vsub.f32 %v727, %v820
        %v840 = vsub.f32 %v728, %v822
        %v841 = vsub.f32 %v729, %v824
        %v842 = vsub.f32 %v730, %v826
        %843 = vst [vmem:[%s271] sm:$0xff] %v827
        %844 = vst [vmem:[%s271 + $0x8] sm:$0xff] %v828
        %845 = vst [vmem:[%s271 + $0x10] sm:$0xff] %v829
        %846 = vst [vmem:[%s271 + $0x18] sm:$0xff] %v830
        %847 = vst [vmem:[%s271 + $0x20] sm:$0xff] %v831
        %848 = vst [vmem:[%s271 + $0x28] sm:$0xff] %v832
        %849 = vst [vmem:[%s271 + $0x30] sm:$0xff] %v833
        %850 = vst [vmem:[%s271 + $0x38] sm:$0xff] %v834
        %851 = vst [vmem:[%s271 + $0x40] sm:$0xff] %v835
        %852 = vst [vmem:[%s271 + $0x48] sm:$0xff] %v836
        %853 = vst [vmem:[%s271 + $0x50] sm:$0xff] %v837
        %854 = vst [vmem:[%s271 + $0x58] sm:$0xff] %v838
        %855 = vst [vmem:[%s271 + $0x60] sm:$0xff] %v839
        %856 = vst [vmem:[%s271 + $0x68] sm:$0xff] %v840
        %857 = vst [vmem:[%s271 + $0x70] sm:$0xff] %v841
        %858 = vst [vmem:[%s271 + $0x78] sm:$0xff] %v842
        %s859 = scalar_lea.vmem %s237, 64 [#allocation2]
        %v860 = vld [vmem:[%s859] sm:$0xf]
        %v861 = vld [vmem:[%s859 + $0x4] sm:$0xf]
        %v862 = vld [vmem:[%s859 + $0x8] sm:$0xf]
        %v863 = vld [vmem:[%s859 + $0xc] sm:$0xf]
        %v864 = vld [vmem:[%s859 + $0x10] sm:$0xf]
        %v865 = vld [vmem:[%s859 + $0x14] sm:$0xf]
        %v866 = vld [vmem:[%s859 + $0x18] sm:$0xf]
        %v867 = vld [vmem:[%s859 + $0x1c] sm:$0xf]
        %v868 = vld [vmem:[%s859 + $0x20] sm:$0xf]
        %v869 = vld [vmem:[%s859 + $0x24] sm:$0xf]
        %v870 = vld [vmem:[%s859 + $0x28] sm:$0xf]
        %v871 = vld [vmem:[%s859 + $0x2c] sm:$0xf]
        %v872 = vld [vmem:[%s859 + $0x30] sm:$0xf]
        %v873 = vld [vmem:[%s859 + $0x34] sm:$0xf]
        %v874 = vld [vmem:[%s859 + $0x38] sm:$0xf]
        %v875 = vld [vmem:[%s859 + $0x3c] sm:$0xf]
        %v892 = vunpack.c.l.b16 %v860
        %v893 = vunpack.c.l.b16 %v861
        %v894 = vunpack.c.l.b16 %v862
        %v895 = vunpack.c.l.b16 %v863
        %v896 = vunpack.c.l.b16 %v864
        %v897 = vunpack.c.l.b16 %v865
        %v898 = vunpack.c.l.b16 %v866
        %v899 = vunpack.c.l.b16 %v867
        %v900 = vunpack.c.l.b16 %v868
        %v901 = vunpack.c.l.b16 %v869
        %v902 = vunpack.c.l.b16 %v870
        %v903 = vunpack.c.l.b16 %v871
        %v904 = vunpack.c.l.b16 %v872
        %v905 = vunpack.c.l.b16 %v873
        %v906 = vunpack.c.l.b16 %v874
        %v907 = vunpack.c.l.b16 %v875
        %v908 = vpack.c.b16 %v893, %v892
        %v909 = vpack.c.b16 %v895, %v894
        %v910 = vpack.c.b16 %v897, %v896
        %v911 = vpack.c.b16 %v899, %v898
        %v912 = vpack.c.b16 %v901, %v900
        %v913 = vpack.c.b16 %v903, %v902
        %v914 = vpack.c.b16 %v905, %v904
        %v915 = vpack.c.b16 %v907, %v906
        %924 = vmatprep.subr.bf16.mxu0 0
        %925 = vmatpush1.bf16.msra.mxu0 %v411
        %926 = vmatprep.subr.bf16.mxu0 0
        %927 = vmatpush1.bf16.msra.mxu0 %v412
        %928 = vmatprep.subr.bf16.mxu0 0
        %929 = vmatpush1.bf16.msra.mxu0 %v413
        %930 = vmatprep.subr.bf16.mxu0 0
        %931 = vmatpush1.bf16.msra.mxu0 %v414
        %932 = vmatprep.subr.bf16.mxu0 0
        %933 = vmatpush1.bf16.msra.mxu0 %v415
        %934 = vmatprep.subr.bf16.mxu0 0
        %935 = vmatpush1.bf16.msra.mxu0 %v416
        %936 = vmatprep.subr.bf16.mxu0 0
        %937 = vmatpush1.bf16.msra.mxu0 %v417
        %938 = vmatprep.subr.bf16.mxu0 0
        %939 = vmatpush1.bf16.msra.mxu0 %v418
        %940 = vmatprep.subr.bf16.mxu0 0
        %941 = vmatpush1.bf16.msra.mxu0 0
        %942 = vmatprep.subr.bf16.mxu0 0
        %943 = vmatpush1.bf16.msra.mxu0 0
        %944 = vmatprep.subr.bf16.mxu0 0
        %945 = vmatpush1.bf16.msra.mxu0 0
        %946 = vmatprep.subr.bf16.mxu0 0
        %947 = vmatpush1.bf16.msra.mxu0 0
        %948 = vmatprep.subr.bf16.mxu0 0
        %949 = vmatpush1.bf16.msra.mxu0 0
        %950 = vmatprep.subr.bf16.mxu0 0
        %951 = vmatpush1.bf16.msra.mxu0 0
        %952 = vmatprep.subr.bf16.mxu0 0
        %953 = vmatpush1.bf16.msra.mxu0 0
        %954 = vmatprep.subr.bf16.mxu0 0
        %955 = vmatpush1.bf16.msra.mxu0 0
        %956 = vmatprep.mubr.bf16.mxu0 0
        %957 = vmatmul.mubr.bf16.gmra.mrb[0].mxu0 %v908
        %v958 = vpop.f32.mrb[0].mxu0
        %v959 = vadd.f32 %v329, %v958
        %v960 = vpop.f32.mrb[0].mxu0
        %v961 = vpop.f32.mrb[0].mxu0
        %v962 = vadd.f32 %v329, %v961
        %v963 = vpop.f32.mrb[0].mxu0
        %964 = vmatprep.mubr.bf16.mxu0 0
        %965 = vmatmul.mubr.bf16.gmra.mrb[0].mxu0 %v909
        %v966 = vpop.f32.mrb[0].mxu0
        %v967 = vadd.f32 %v329, %v966
        %v968 = vpop.f32.mrb[0].mxu0
        %v969 = vpop.f32.mrb[0].mxu0
        %v970 = vadd.f32 %v329, %v969
        %v971 = vpop.f32.mrb[0].mxu0
        %972 = vmatprep.mubr.bf16.mxu0 0
        %973 = vmatmul.mubr.bf16.gmra.mrb[0].mxu0 %v910
        %v974 = vpop.f32.mrb[0].mxu0
        %v975 = vadd.f32 %v329, %v974
        %v976 = vpop.f32.mrb[0].mxu0
        %v977 = vpop.f32.mrb[0].mxu0
        %v978 = vadd.f32 %v329, %v977
        %v979 = vpop.f32.mrb[0].mxu0
        %980 = vmatprep.mubr.bf16.mxu0 0
        %981 = vmatmul.mubr.bf16.gmra.mrb[0].mxu0 %v911
        %v982 = vpop.f32.mrb[0].mxu0
        %v983 = vadd.f32 %v329, %v982
        %v984 = vpop.f32.mrb[0].mxu0
        %v985 = vpop.f32.mrb[0].mxu0
        %v986 = vadd.f32 %v329, %v985
        %v987 = vpop.f32.mrb[0].mxu0
        %988 = vmatprep.mubr.bf16.mxu0 0
        %989 = vmatmul.mubr.bf16.gmra.mrb[0].mxu0 %v912
        %v990 = vpop.f32.mrb[0].mxu0
        %v991 = vadd.f32 %v329, %v990
        %v992 = vpop.f32.mrb[0].mxu0
        %v993 = vpop.f32.mrb[0].mxu0
        %v994 = vadd.f32 %v329, %v993
        %v995 = vpop.f32.mrb[0].mxu0
        %996 = vmatprep.mubr.bf16.mxu0 0
        %997 = vmatmul.mubr.bf16.gmra.mrb[0].mxu0 %v913
        %v998 = vpop.f32.mrb[0].mxu0
        %v999 = vadd.f32 %v329, %v998
        %v1000 = vpop.f32.mrb[0].mxu0
        %v1001 = vpop.f32.mrb[0].mxu0
        %v1002 = vadd.f32 %v329, %v1001
        %v1003 = vpop.f32.mrb[0].mxu0
        %1004 = vmatprep.mubr.bf16.mxu0 0
        %1005 = vmatmul.mubr.bf16.gmra.mrb[0].mxu0 %v914
        %v1006 = vpop.f32.mrb[0].mxu0
        %v1007 = vadd.f32 %v329, %v1006
        %v1008 = vpop.f32.mrb[0].mxu0
        %v1009 = vpop.f32.mrb[0].mxu0
        %v1010 = vadd.f32 %v329, %v1009
        %v1011 = vpop.f32.mrb[0].mxu0
        %1012 = vmatprep.mubr.bf16.mxu0 0
        %1013 = vmatmul.mubr.bf16.gmra.mrb[0].mxu0 %v915
        %v1014 = vpop.f32.mrb[0].mxu0
        %v1015 = vadd.f32 %v329, %v1014
        %v1016 = vpop.f32.mrb[0].mxu0
        %v1017 = vpop.f32.mrb[0].mxu0
        %v1018 = vadd.f32 %v329, %v1017
        %v1019 = vpop.f32.mrb[0].mxu0
        %1020 = vdwg.mxu0
        %v1021 = vpack.c.bf16 %v962, %v959
        %v1022 = vpack.c.bf16 %v970, %v967
        %v1023 = vpack.c.bf16 %v978, %v975
        %v1024 = vpack.c.bf16 %v986, %v983
        %v1025 = vpack.c.bf16 %v994, %v991
        %v1026 = vpack.c.bf16 %v1002, %v999
        %v1027 = vpack.c.bf16 %v1010, %v1007
        %v1028 = vpack.c.bf16 %v1018, %v1015
        %1029 = vmatprep.subr.bf16.mxu0 0
        %1030 = vmatpush1.bf16.msra.mxu0 %v570
        %1031 = vmatprep.subr.bf16.mxu0 0
        %1032 = vmatpush1.bf16.msra.mxu0 %v571
        %1033 = vmatprep.subr.bf16.mxu0 0
        %1034 = vmatpush1.bf16.msra.mxu0 %v572
        %1035 = vmatprep.subr.bf16.mxu0 0
        %1036 = vmatpush1.bf16.msra.mxu0 %v573
        %1037 = vmatprep.subr.bf16.mxu0 0
        %1038 = vmatpush1.bf16.msra.mxu0 %v574
        %1039 = vmatprep.subr.bf16.mxu0 0
        %1040 = vmatpush1.bf16.msra.mxu0 %v575
        %1041 = vmatprep.subr.bf16.mxu0 0
        %1042 = vmatpush1.bf16.msra.mxu0 %v576
        %1043 = vmatprep.subr.bf16.mxu0 0
        %1044 = vmatpush1.bf16.msra.mxu0 %v577
        %1045 = vmatprep.subr.bf16.mxu0 0
        %1046 = vmatpush1.bf16.msra.mxu0 0
        %1047 = vmatprep.subr.bf16.mxu0 0
        %1048 = vmatpush1.bf16.msra.mxu0 0
        %1049 = vmatprep.subr.bf16.mxu0 0
        %1050 = vmatpush1.bf16.msra.mxu0 0
        %1051 = vmatprep.subr.bf16.mxu0 0
        %1052 = vmatpush1.bf16.msra.mxu0 0
        %1053 = vmatprep.subr.bf16.mxu0 0
        %1054 = vmatpush1.bf16.msra.mxu0 0
        %1055 = vmatprep.subr.bf16.mxu0 0
        %1056 = vmatpush1.bf16.msra.mxu0 0
        %1057 = vmatprep.subr.bf16.mxu0 0
        %1058 = vmatpush1.bf16.msra.mxu0 0
        %1059 = vmatprep.subr.bf16.mxu0 0
        %1060 = vmatpush1.bf16.msra.mxu0 0
        %1061 = vmatprep.mubr.bf16.mxu0 0
        %1062 = vmatmul.mubr.bf16.gmra.mrb[0].mxu0 %v1021
        %v1063 = vpop.f32.mrb[0].mxu0
        %v1064 = vadd.f32 %v536, %v1063
        %v1065 = vpop.f32.mrb[0].mxu0
        %v1066 = vpop.f32.mrb[0].mxu0
        %v1067 = vadd.f32 %v536, %v1066
        %v1068 = vpop.f32.mrb[0].mxu0
        %1069 = vmatprep.mubr.bf16.mxu0 0
        %1070 = vmatmul.mubr.bf16.gmra.mrb[0].mxu0 %v1022
        %v1071 = vpop.f32.mrb[0].mxu0
        %v1072 = vadd.f32 %v536, %v1071
        %v1073 = vpop.f32.mrb[0].mxu0
        %v1074 = vpop.f32.mrb[0].mxu0
        %v1075 = vadd.f32 %v536, %v1074
        %v1076 = vpop.f32.mrb[0].mxu0
        %1077 = vmatprep.mubr.bf16.mxu0 0
        %1078 = vmatmul.mubr.bf16.gmra.mrb[0].mxu0 %v1023
        %v1079 = vpop.f32.mrb[0].mxu0
        %v1080 = vadd.f32 %v536, %v1079
        %v1081 = vpop.f32.mrb[0].mxu0
        %v1082 = vpop.f32.mrb[0].mxu0
        %v1083 = vadd.f32 %v536, %v1082
        %v1084 = vpop.f32.mrb[0].mxu0
        %1085 = vmatprep.mubr.bf16.mxu0 0
        %1086 = vmatmul.mubr.bf16.gmra.mrb[0].mxu0 %v1024
        %v1087 = vpop.f32.mrb[0].mxu0
        %v1088 = vadd.f32 %v536, %v1087
        %v1089 = vpop.f32.mrb[0].mxu0
        %v1090 = vpop.f32.mrb[0].mxu0
        %v1091 = vadd.f32 %v536, %v1090
        %v1092 = vpop.f32.mrb[0].mxu0
        %1093 = vmatprep.mubr.bf16.mxu0 0
        %1094 = vmatmul.mubr.bf16.gmra.mrb[0].mxu0 %v1025
        %v1095 = vpop.f32.mrb[0].mxu0
        %v1096 = vadd.f32 %v536, %v1095
        %v1097 = vpop.f32.mrb[0].mxu0
        %v1098 = vpop.f32.mrb[0].mxu0
        %v1099 = vadd.f32 %v536, %v1098
        %v1100 = vpop.f32.mrb[0].mxu0
        %1101 = vmatprep.mubr.bf16.mxu0 0
        %1102 = vmatmul.mubr.bf16.gmra.mrb[0].mxu0 %v1026
        %v1103 = vpop.f32.mrb[0].mxu0
        %v1104 = vadd.f32 %v536, %v1103
        %v1105 = vpop.f32.mrb[0].mxu0
        %v1106 = vpop.f32.mrb[0].mxu0
        %v1107 = vadd.f32 %v536, %v1106
        %v1108 = vpop.f32.mrb[0].mxu0
        %1109 = vmatprep.mubr.bf16.mxu0 0
        %1110 = vmatmul.mubr.bf16.gmra.mrb[0].mxu0 %v1027
        %v1111 = vpop.f32.mrb[0].mxu0
        %v1112 = vadd.f32 %v536, %v1111
        %v1113 = vpop.f32.mrb[0].mxu0
        %v1114 = vpop.f32.mrb[0].mxu0
        %v1115 = vadd.f32 %v536, %v1114
        %v1116 = vpop.f32.mrb[0].mxu0
        %1117 = vmatprep.mubr.bf16.mxu0 0
        %1118 = vmatmul.mubr.bf16.gmra.mrb[0].mxu0 %v1028
        %v1119 = vpop.f32.mrb[0].mxu0
        %v1120 = vadd.f32 %v536, %v1119
        %v1121 = vpop.f32.mrb[0].mxu0
        %v1122 = vpop.f32.mrb[0].mxu0
        %v1123 = vadd.f32 %v536, %v1122
        %v1124 = vpop.f32.mrb[0].mxu0
        %1125 = vdwg.mxu0
        %1126 = vmax.xlane.f32.xlu0 %v1064
        %v1127 = vpop.xlane.xlu0 %1126
        %1128 = vmax.xlane.f32.xlu0 %v1067
        %v1129 = vpop.xlane.xlu0 %1128
        %1130 = vmax.xlane.f32.xlu0 %v1072
        %v1131 = vpop.xlane.xlu0 %1130
        %1132 = vmax.xlane.f32.xlu0 %v1075
        %v1133 = vpop.xlane.xlu0 %1132
        %1134 = vmax.xlane.f32.xlu0 %v1080
        %v1135 = vpop.xlane.xlu0 %1134
        %1136 = vmax.xlane.f32.xlu0 %v1083
        %v1137 = vpop.xlane.xlu0 %1136
        %1138 = vmax.xlane.f32.xlu0 %v1088
        %v1139 = vpop.xlane.xlu0 %1138
        %1140 = vmax.xlane.f32.xlu0 %v1091
        %v1141 = vpop.xlane.xlu0 %1140
        %1142 = vmax.xlane.f32.xlu0 %v1096
        %v1143 = vpop.xlane.xlu0 %1142
        %1144 = vmax.xlane.f32.xlu0 %v1099
        %v1145 = vpop.xlane.xlu0 %1144
        %1146 = vmax.xlane.f32.xlu0 %v1104
        %v1147 = vpop.xlane.xlu0 %1146
        %1148 = vmax.xlane.f32.xlu0 %v1107
        %v1149 = vpop.xlane.xlu0 %1148
        %1150 = vmax.xlane.f32.xlu0 %v1112
        %v1151 = vpop.xlane.xlu0 %1150
        %1152 = vmax.xlane.f32.xlu0 %v1115
        %v1153 = vpop.xlane.xlu0 %1152
        %1154 = vmax.xlane.f32.xlu0 %v1120
        %v1155 = vpop.xlane.xlu0 %1154
        %1156 = vmax.xlane.f32.xlu0 %v1123
        %v1157 = vpop.xlane.xlu0 %1156
        %v1158 = vsub.f32 %v1064, %v1127
        %v1159 = vsub.f32 %v1067, %v1129
        %v1160 = vsub.f32 %v1072, %v1131
        %v1161 = vsub.f32 %v1075, %v1133
        %v1162 = vsub.f32 %v1080, %v1135
        %v1163 = vsub.f32 %v1083, %v1137
        %v1164 = vsub.f32 %v1088, %v1139
        %v1165 = vsub.f32 %v1091, %v1141
        %v1166 = vsub.f32 %v1096, %v1143
        %v1167 = vsub.f32 %v1099, %v1145
        %v1168 = vsub.f32 %v1104, %v1147
        %v1169 = vsub.f32 %v1107, %v1149
        %v1170 = vsub.f32 %v1112, %v1151
        %v1171 = vsub.f32 %v1115, %v1153
        %v1172 = vsub.f32 %v1120, %v1155
        %v1173 = vsub.f32 %v1123, %v1157
        %v1174 = vmul.f32 %v1158, 1.442695
        %v1175 = vpow.pop %v1174
        %v1176 = vmul.f32 %v1159, 1.442695
        %v1177 = vpow.pop %v1176
        %v1178 = vmul.f32 %v1160, 1.442695
        %v1179 = vpow.pop %v1178
        %v1180 = vmul.f32 %v1161, 1.442695
        %v1181 = vpow.pop %v1180
        %v1182 = vmul.f32 %v1162, 1.442695
        %v1183 = vpow.pop %v1182
        %v1184 = vmul.f32 %v1163, 1.442695
        %v1185 = vpow.pop %v1184
        %v1186 = vmul.f32 %v1164, 1.442695
        %v1187 = vpow.pop %v1186
        %v1188 = vmul.f32 %v1165, 1.442695
        %v1189 = vpow.pop %v1188
        %v1190 = vmul.f32 %v1166, 1.442695
        %v1191 = vpow.pop %v1190
        %v1192 = vmul.f32 %v1167, 1.442695
        %v1193 = vpow.pop %v1192
        %v1194 = vmul.f32 %v1168, 1.442695
        %v1195 = vpow.pop %v1194
        %v1196 = vmul.f32 %v1169, 1.442695
        %v1197 = vpow.pop %v1196
        %v1198 = vmul.f32 %v1170, 1.442695
        %v1199 = vpow.pop %v1198
        %v1200 = vmul.f32 %v1171, 1.442695
        %v1201 = vpow.pop %v1200
        %v1202 = vmul.f32 %v1172, 1.442695
        %v1203 = vpow.pop %v1202
        %v1204 = vmul.f32 %v1173, 1.442695
        %v1205 = vpow.pop %v1204
        %1206 = vadd.xlane.f32.xlu0 %v1175
        %v1207 = vpop.xlane.xlu0 %1206
        %1208 = vadd.xlane.f32.xlu0 %v1177
        %v1209 = vpop.xlane.xlu0 %1208
        %1210 = vadd.xlane.f32.xlu0 %v1179
        %v1211 = vpop.xlane.xlu0 %1210
        %1212 = vadd.xlane.f32.xlu0 %v1181
        %v1213 = vpop.xlane.xlu0 %1212
        %1214 = vadd.xlane.f32.xlu0 %v1183
        %v1215 = vpop.xlane.xlu0 %1214
        %1216 = vadd.xlane.f32.xlu0 %v1185
        %v1217 = vpop.xlane.xlu0 %1216
        %1218 = vadd.xlane.f32.xlu0 %v1187
        %v1219 = vpop.xlane.xlu0 %1218
        %1220 = vadd.xlane.f32.xlu0 %v1189
        %v1221 = vpop.xlane.xlu0 %1220
        %1222 = vadd.xlane.f32.xlu0 %v1191
        %v1223 = vpop.xlane.xlu0 %1222
        %1224 = vadd.xlane.f32.xlu0 %v1193
        %v1225 = vpop.xlane.xlu0 %1224
        %1226 = vadd.xlane.f32.xlu0 %v1195
        %v1227 = vpop.xlane.xlu0 %1226
        %1228 = vadd.xlane.f32.xlu0 %v1197
        %v1229 = vpop.xlane.xlu0 %1228
        %1230 = vadd.xlane.f32.xlu0 %v1199
        %v1231 = vpop.xlane.xlu0 %1230
        %1232 = vadd.xlane.f32.xlu0 %v1201
        %v1233 = vpop.xlane.xlu0 %1232
        %1234 = vadd.xlane.f32.xlu0 %v1203
        %v1235 = vpop.xlane.xlu0 %1234
        %1236 = vadd.xlane.f32.xlu0 %v1205
        %v1237 = vpop.xlane.xlu0 %1236
        %v1238 = vlog2.pop %v1207
        %v1239 = vmul.f32 %v1238, 0.6931472
        %v1240 = vlog2.pop %v1209
        %v1241 = vmul.f32 %v1240, 0.6931472
        %v1242 = vlog2.pop %v1211
        %v1243 = vmul.f32 %v1242, 0.6931472
        %v1244 = vlog2.pop %v1213
        %v1245 = vmul.f32 %v1244, 0.6931472
        %v1246 = vlog2.pop %v1215
        %v1247 = vmul.f32 %v1246, 0.6931472
        %v1248 = vlog2.pop %v1217
        %v1249 = vmul.f32 %v1248, 0.6931472
        %v1250 = vlog2.pop %v1219
        %v1251 = vmul.f32 %v1250, 0.6931472
        %v1252 = vlog2.pop %v1221
        %v1253 = vmul.f32 %v1252, 0.6931472
        %v1254 = vlog2.pop %v1223
        %v1255 = vmul.f32 %v1254, 0.6931472
        %v1256 = vlog2.pop %v1225
        %v1257 = vmul.f32 %v1256, 0.6931472
        %v1258 = vlog2.pop %v1227
        %v1259 = vmul.f32 %v1258, 0.6931472
        %v1260 = vlog2.pop %v1229
        %v1261 = vmul.f32 %v1260, 0.6931472
        %v1262 = vlog2.pop %v1231
        %v1263 = vmul.f32 %v1262, 0.6931472
        %v1264 = vlog2.pop %v1233
        %v1265 = vmul.f32 %v1264, 0.6931472
        %v1266 = vlog2.pop %v1235
        %v1267 = vmul.f32 %v1266, 0.6931472
        %v1268 = vlog2.pop %v1237
        %v1269 = vmul.f32 %v1268, 0.6931472
        %v1270 = vsub.f32 %v1158, %v1239
        %v1271 = vsub.f32 %v1159, %v1241
        %v1272 = vsub.f32 %v1160, %v1243
        %v1273 = vsub.f32 %v1161, %v1245
        %v1274 = vsub.f32 %v1162, %v1247
        %v1275 = vsub.f32 %v1163, %v1249
        %v1276 = vsub.f32 %v1164, %v1251
        %v1277 = vsub.f32 %v1165, %v1253
        %v1278 = vsub.f32 %v1166, %v1255
        %v1279 = vsub.f32 %v1167, %v1257
        %v1280 = vsub.f32 %v1168, %v1259
        %v1281 = vsub.f32 %v1169, %v1261
        %v1282 = vsub.f32 %v1170, %v1263
        %v1283 = vsub.f32 %v1171, %v1265
        %v1284 = vsub.f32 %v1172, %v1267
        %v1285 = vsub.f32 %v1173, %v1269
        %s1286 = scalar_lea.vmem %s271, 128 [#allocation8]
        %1287 = vst [vmem:[%s1286] sm:$0xff] %v1270
        %1288 = vst [vmem:[%s1286 + $0x8] sm:$0xff] %v1271
        %1289 = vst [vmem:[%s1286 + $0x10] sm:$0xff] %v1272
        %1290 = vst [vmem:[%s1286 + $0x18] sm:$0xff] %v1273
        %1291 = vst [vmem:[%s1286 + $0x20] sm:$0xff] %v1274
        %1292 = vst [vmem:[%s1286 + $0x28] sm:$0xff] %v1275
        %1293 = vst [vmem:[%s1286 + $0x30] sm:$0xff] %v1276
        %1294 = vst [vmem:[%s1286 + $0x38] sm:$0xff] %v1277
        %1295 = vst [vmem:[%s1286 + $0x40] sm:$0xff] %v1278
        %1296 = vst [vmem:[%s1286 + $0x48] sm:$0xff] %v1279
        %1297 = vst [vmem:[%s1286 + $0x50] sm:$0xff] %v1280
        %1298 = vst [vmem:[%s1286 + $0x58] sm:$0xff] %v1281
        %1299 = vst [vmem:[%s1286 + $0x60] sm:$0xff] %v1282
        %1300 = vst [vmem:[%s1286 + $0x68] sm:$0xff] %v1283
        %1301 = vst [vmem:[%s1286 + $0x70] sm:$0xff] %v1284
        %1302 = vst [vmem:[%s1286 + $0x78] sm:$0xff] %v1285
        %s1303 = sand.u32 %s141, 1
        %s1304 = scalar_lea.sflag [#allocation4], %s1303
        %s1305 = sand.u32 %s141, 1
        %s1306 = smul.addr %s1305, 256
        %s1307 = scalar_lea.vmem [#allocation8], %s1306
        // Predicated region
        $region53: #{tpu_custom_call.1} parent=39 // pred_check
          %p1308 = pneg %p151
        $region54: #{tpu_custom_call.1} parent=39 // pred_check_branch
          %1310 = sbr.rel (%p1308) target = $region56
        $region55: #{tpu_custom_call.1} parent=39 // pred_region
          %s1311 = smul.u32 32, %s23
          %s1313 = ssub.s32 4096, 4096
          %1314 = vsyncadd %s1304, %s1313
          %s1315 = smul.addr %s1311, 128
          %s1316 = scalar_lea.hbm %s5, %s1315
          %s1317 = sshll.u32 %s1307, 4
          %s1318 = int_to_ptr.vmem [resolvable:$true] %s1317
          %1323 = dma.vmem_to_hbm [thread:$0]  %s1318, 4096, %s1316, %s1304, 128, 128, 8
        $region56: #{tpu_custom_call.1} parent=39 // pred_fallthru
          _
      $region40: #{tpu_custom_call.1} parent=5 // pred_fallthru
        _
      %p1324 = scmp.le.s32.totalorder 2, %s18
      // Predicated region
      $region57: #{tpu_custom_call.1} parent=5 // pred_check
        %p1325 = pneg %p1324
      $region58: #{tpu_custom_call.1} parent=5 // pred_check_branch
        %1327 = sbr.rel (%p1325) target = $region60
      $region59: #{tpu_custom_call.1} parent=5 // pred_region
        %s1328 = ssub.s32 %s18, 2
        // Predicated region
        $region61: #{tpu_custom_call.1} parent=59 // pred_check
          %p1329 = pneg %p157
        $region62: #{tpu_custom_call.1} parent=59 // pred_check_branch
          %1331 = sbr.rel (%p1329) target = $region64
        $region63: #{tpu_custom_call.1} parent=59 // pred_region
          %s1332 = sand.u32 %s142, 1
          %s1333 = scalar_lea.sflag [#allocation4], %s1332
          %s1334 = sand.u32 %s142, 1
          %s1335 = smul.addr %s1334, 256
          %s1336 = scalar_lea.vmem [#allocation8], %s1335
          %1337 = dma.done %s1333, 4096
        $region64: #{tpu_custom_call.1} parent=59 // pred_fallthru
          _
      $region60: #{tpu_custom_call.1} parent=5 // pred_fallthru
        _
    $region6: #{tpu_custom_call.1} parent=1 // loop_footer
      %s22 = sadd.s32 1, %s18
    $region7: #{tpu_custom_call.1} parent=1 // loop_footer_branch
      %17 = sbr.rel target = $region3
    $region8: #{tpu_custom_call.1} parent=1 // loop_exit
      _
    %1338 = vsyncpa [#allocation3], 1
    %s1339 = scalar_lea.sflag [#allocation3], 1
    %1340 = vsyncpa %s1339, 1
    %1341 = vsyncpa [#allocation6], 1
    %1342 = vsyncpa [#allocation4], 1
    %s1343 = scalar_lea.sflag [#allocation4], 1
    %1344 = vsyncpa %s1343, 1

</llo_original>
